<compile_context>
chip_gen: v7x
topology: tpu7x:2x2x1
jax: 0.10.0
libtpu: 0.0.40
codegen_flags: <defaults>
</compile_context>

<pallas_src>
import functools

import numpy as np

import jax
import jax.numpy as jnp
from jax.experimental import pallas as pl
from jax.experimental.pallas import tpu as pltpu


def _round_up(x, m):
    return ((x + m - 1) // m) * m


# ----------------------------------------------------------------------------
# Kernel
# ----------------------------------------------------------------------------
def _lstm_char_net_kernel(metas, num_pre_layers, B, T, E,
                          x_ref, p_ref, out_ref):
    """Fused embedding-MLP + LSTM, single grid-less invocation.

    x_ref   : (T*B, F)   time-major inputs
    p_ref   : (R, W)     packed parameter slab; blocks described by `metas`
    out_ref : (B, T*E)   row-major == (B, T, E)
    metas   : static tuple of (row_start, n_rows, n_cols) per parameter block,
              order: [w0, b0, w1, b1, ..., W_fold, b_fold, W_hh_all]
    """
    def load(idx):
        r, nr, nc = metas[idx]
        return p_ref[pl.ds(r, nr), pl.ds(0, nc)]

    # ---- 1) embedding-net pre-layers (Linear + ReLU), time-parallel --------
    a = x_ref[...]                                       # (T*B, F)
    mi = 0
    for _ in range(num_pre_layers):
        w = load(mi); mi += 1                            # (in, out)
        b = load(mi); mi += 1                            # (1, out)
        a = jnp.maximum(
            jnp.dot(a, w, preferred_element_type=jnp.float32) + b, 0.0)

    # ---- 2) last MLP layer folded into LSTM input projection (one matmul) --
    w_fold = load(mi); mi += 1                           # (H_prev, 4E)
    b_fold = load(mi); mi += 1                           # (1, 4E)
    gates_x = (jnp.dot(a, w_fold, preferred_element_type=jnp.float32)
               + b_fold)                                 # (T*B, 4E), time-major
    whh = load(mi); mi += 1                              # (E, 4E)

    # ---- 3) serial LSTM recurrence, fully unrolled (T is small) ------------
    # PyTorch gate order: input, forget, cell(g), output; h0 = c0 = 0.
    h = jnp.zeros((B, E), jnp.float32)
    c = jnp.zeros((B, E), jnp.float32)
    hs = []
    for t in range(T):
        g = gates_x[t * B:(t + 1) * B, :] + jnp.dot(
            h, whh, preferred_element_type=jnp.float32)  # (B, 4E), one MXU push
        i_g = jax.nn.sigmoid(g[:, 0 * E:1 * E])
        f_g = jax.nn.sigmoid(g[:, 1 * E:2 * E])
        g_g = jnp.tanh(g[:, 2 * E:3 * E])
        o_g = jax.nn.sigmoid(g[:, 3 * E:4 * E])
        c = f_g * c + i_g * g_g
        h = o_g * jnp.tanh(c)
        hs.append(h)

    # ---- 4) one lane-dense store: (B, T*E) row-major == (B, T, E) ----------
    out_ref[...] = jnp.concatenate(hs, axis=-1)


# ----------------------------------------------------------------------------
# Parameter packing (one contiguous VMEM slab, static carve offsets)
# ----------------------------------------------------------------------------
def _pack_params(params):
    mlp = params["mlp"]
    L = len(mlp)

    # Fold the last Linear into the LSTM input projection (no ReLU after it).
    w_last, b_last = mlp[-1]                              # (E, H_prev), (E,)
    wih_t = params["w_ih"].T                              # (E, 4E)
    w_fold = w_last.T @ wih_t                             # (H_prev, 4E)
    b_fold = (b_last @ wih_t + params["b_ih"]
              + params["b_hh"]).reshape(1, -1)            # (1, 4E)
    whh_all = params["w_hh"].T                            # (E, 4E)

    blocks = []
    for i in range(L - 1):
        w, b = mlp[i]
        blocks.append(w.T)                                # (in, out)
        blocks.append(b.reshape(1, -1))                   # (1, out)
    blocks += [w_fold, b_fold, whh_all]

    width = _round_up(max(int(b.shape[1]) for b in blocks), 128)
    metas = []
    r = 0
    for blk in blocks:
        nr, nc = int(blk.shape[0]), int(blk.shape[1])
        metas.append((r, nr, nc))
        r = _round_up(r + nr, 8)                          # keep sublane-aligned starts
    total_rows = _round_up(r, 8)

    packed = jnp.zeros((total_rows, width), jnp.float32)
    for blk, (ro, nr, nc) in zip(blocks, metas):
        packed = packed.at[ro:ro + nr, :nc].set(blk.astype(jnp.float32))
    return packed, tuple(metas), L - 1


# ----------------------------------------------------------------------------
# Wrapper
# ----------------------------------------------------------------------------
def lstm_character_net_forward(trajectory, params, hidden_state_indices=None):
    """trajectory: (B, T, F) float32 (PyTorch batch_first convention)."""
    B, T, F = trajectory.shape
    E = params["w_hh"].shape[1]

    packed, metas, num_pre = _pack_params(params)

    # Time-major: (B,T,F) -> (T,B,F) -> (T*B,F). One-off tiny XLA transpose;
    # makes each step's gate rows a contiguous sublane block in the kernel.
    x_tm = jnp.transpose(trajectory.astype(jnp.float32), (1, 0, 2)).reshape(T * B, F)

    vmem = pl.BlockSpec(memory_space=pltpu.MemorySpace.VMEM)
    kernel = functools.partial(_lstm_char_net_kernel, metas, num_pre, B, T, E)

    out_flat = pl.pallas_call(
        kernel,
        out_shape=jax.ShapeDtypeStruct((B, T * E), jnp.float32),
        in_specs=[vmem, vmem],
        out_specs=vmem,
    )(x_tm, packed)

    out_bte = out_flat.reshape(B, T, E)   # free row-major regrouping

    if hidden_state_indices is None:
        # PyTorch `out[:, None]` with a None index inserts a new axis.
        return out_bte[:, None]
    return out_bte[:, hidden_state_indices]


# ----------------------------------------------------------------------------
# Pure-JAX reference (mirrors the PyTorch module exactly)
# ----------------------------------------------------------------------------
def _reference_forward(trajectory, params, hidden_state_indices=None):
    a = trajectory.astype(jnp.float32)
    L = len(params["mlp"])
    for i, (w, b) in enumerate(params["mlp"]):
        a = a @ w.T + b
        if i < L - 1:
            a = jnp.maximum(a, 0.0)
    B, T, E = a.shape
    w_ih, w_hh = params["w_ih"], params["w_hh"]
    b_ih, b_hh = params["b_ih"], params["b_hh"]
    h = jnp.zeros((B, E), jnp.float32)
    c = jnp.zeros((B, E), jnp.float32)
    outs = []
    for t in range(T):
        g = a[:, t, :] @ w_ih.T + b_ih + h @ w_hh.T + b_hh
        i_g = jax.nn.sigmoid(g[:, 0 * E:1 * E])
        f_g = jax.nn.sigmoid(g[:, 1 * E:2 * E])
        g_g = jnp.tanh(g[:, 2 * E:3 * E])
        o_g = jax.nn.sigmoid(g[:, 3 * E:4 * E])
        c = f_g * c + i_g * g_g
        h = o_g * jnp.tanh(c)
        outs.append(h)
    out = jnp.stack(outs, axis=1)
    if hidden_state_indices is None:
        return out[:, None]
    return out[:, hidden_state_indices]


# ----------------------------------------------------------------------------
# Deterministic parameter construction (PyTorch-style uniform init)
# ----------------------------------------------------------------------------
def make_params(key, num_joint_agent_features, hidden_layer_features,
                embedding_size):
    if hidden_layer_features is None:
        hidden_layer_features = []
    dims = [num_joint_agent_features] + hidden_layer_features + [embedding_size]

    params = {"mlp": []}
    for i in range(len(dims) - 1):
        key, kw, kb = jax.random.split(key, 3)
        bound = 1.0 / jnp.sqrt(dims[i])
        w = jax.random.uniform(kw, (dims[i + 1], dims[i]), jnp.float32,
                               -bound, bound)          # PyTorch (out, in)
        b = jax.random.uniform(kb, (dims[i + 1],), jnp.float32, -bound, bound)
        params["mlp"].append((w, b))

    E = embedding_size
    bound = 1.0 / jnp.sqrt(E)
    key, k1, k2, k3, k4 = jax.random.split(key, 5)
    params["w_ih"] = jax.random.uniform(k1, (4 * E, E), jnp.float32, -bound, bound)
    params["w_hh"] = jax.random.uniform(k2, (4 * E, E), jnp.float32, -bound, bound)
    params["b_ih"] = jax.random.uniform(k3, (4 * E,), jnp.float32, -bound, bound)
    params["b_hh"] = jax.random.uniform(k4, (4 * E,), jnp.float32, -bound, bound)
    # TODO(synk): num_layers > 1 LSTM stacking not implemented (module default is 1).
    return params


# ----------------------------------------------------------------------------
if __name__ == "__main__":
    B, T = 2, 8
    num_joint_agent_features = 16
    hidden_layer_features = [32]
    embedding_size = 32

    key = jax.random.PRNGKey(0)
    key, kx = jax.random.split(key)
    trajectory = jax.random.normal(kx, (B, T, num_joint_agent_features),
                                   jnp.float32)

    params = make_params(key, num_joint_agent_features, hidden_layer_features,
                         embedding_size)

    hidden_state_indices = jnp.array([3, T - 1], dtype=jnp.int32)
    out = lstm_character_net_forward(trajectory, params, hidden_state_indices)
    out = jax.block_until_ready(out)

    assert out.shape == (B, hidden_state_indices.shape[0], embedding_size)

    ref = jax.block_until_ready(
        _reference_forward(trajectory, params, hidden_state_indices))
    np.testing.assert_allclose(np.asarray(out), np.asarray(ref),
                               rtol=1e-3, atol=1e-3)

    print("KERNEL_OK")
</pallas_src>

<mosaic_0001>
module attributes {stable_mosaic.version = 11 : i64} {
  func.func @_lstm_char_net_kernel(%arg0: memref<16x16xf32, #tpu.memory_space<vmem>>, %arg1: memref<96x128xf32, #tpu.memory_space<vmem>>, %arg2: memref<2x256xf32, #tpu.memory_space<vmem>>) attributes {dimension_semantics = [], scalar_prefetch = 0 : i64, scratch_operands = 0 : i64, tpu.core_type = #tpu.core_type<tc>} {
    %c0 = arith.constant 0 : index
    %c0_0 = arith.constant 0 : index
    %0 = vector.load %arg0[%c0, %c0_0] : memref<16x16xf32, #tpu.memory_space<vmem>>, vector<16x16xf32>
    %c0_1 = arith.constant 0 : index
    %c0_2 = arith.constant 0 : index
    %1 = vector.load %arg1[%c0_1, %c0_2] : memref<96x128xf32, #tpu.memory_space<vmem>>, vector<16x32xf32>
    %c16 = arith.constant 16 : index
    %c0_3 = arith.constant 0 : index
    %2 = vector.load %arg1[%c16, %c0_3] : memref<96x128xf32, #tpu.memory_space<vmem>>, vector<1x32xf32>
    %cst = arith.constant dense<0.000000e+00> : vector<16x32xf32>
    %3 = tpu.matmul %0, %1, %cst {dimension_numbers = #tpu.dot_dimension_numbers<[1], [0], [0], [1], [0, 0, 1, 1], [], []>} : vector<16x16xf32>, vector<16x32xf32>, vector<16x32xf32> -> vector<16x32xf32>
    %4 = vector.broadcast %2 : vector<1x32xf32> to vector<16x32xf32>
    %5 = arith.addf %3, %4 : vector<16x32xf32>
    %cst_4 = arith.constant 0.000000e+00 : f32
    %6 = vector.broadcast %cst_4 : f32 to vector<16x32xf32>
    %7 = arith.maximumf %5, %6 : vector<16x32xf32>
    %c24 = arith.constant 24 : index
    %c0_5 = arith.constant 0 : index
    %8 = vector.load %arg1[%c24, %c0_5] : memref<96x128xf32, #tpu.memory_space<vmem>>, vector<32x128xf32>
    %c56 = arith.constant 56 : index
    %c0_6 = arith.constant 0 : index
    %9 = vector.load %arg1[%c56, %c0_6] : memref<96x128xf32, #tpu.memory_space<vmem>>, vector<1x128xf32>
    %cst_7 = arith.constant dense<0.000000e+00> : vector<16x128xf32>
    %10 = tpu.matmul %7, %8, %cst_7 {dimension_numbers = #tpu.dot_dimension_numbers<[1], [0], [0], [1], [0, 0, 1, 1], [], []>} : vector<16x32xf32>, vector<32x128xf32>, vector<16x128xf32> -> vector<16x128xf32>
    %11 = vector.broadcast %9 : vector<1x128xf32> to vector<16x128xf32>
    %12 = arith.addf %10, %11 : vector<16x128xf32>
    %c64 = arith.constant 64 : index
    %c0_8 = arith.constant 0 : index
    %13 = vector.load %arg1[%c64, %c0_8] : memref<96x128xf32, #tpu.memory_space<vmem>>, vector<32x128xf32>
    %cst_9 = arith.constant 0.000000e+00 : f32
    %14 = vector.broadcast %cst_9 : f32 to vector<2x32xf32>
    %cst_10 = arith.constant 0.000000e+00 : f32
    %15 = vector.broadcast %cst_10 : f32 to vector<2x32xf32>
    %16 = vector.extract_strided_slice %12 {offsets = [0, 0], sizes = [2, 128], strides = [1, 1]} : vector<16x128xf32> to vector<2x128xf32>
    %cst_11 = arith.constant dense<0.000000e+00> : vector<2x128xf32>
    %17 = tpu.matmul %14, %13, %cst_11 {dimension_numbers = #tpu.dot_dimension_numbers<[1], [0], [0], [1], [0, 0, 1, 1], [], []>} : vector<2x32xf32>, vector<32x128xf32>, vector<2x128xf32> -> vector<2x128xf32>
    %18 = arith.addf %16, %17 : vector<2x128xf32>
    %19 = vector.extract_strided_slice %18 {offsets = [0, 0], sizes = [2, 32], strides = [1, 1]} : vector<2x128xf32> to vector<2x32xf32>
    %20 = arith.negf %19 : vector<2x32xf32>
    %21 = math.exp %20 : vector<2x32xf32>
    %cst_12 = arith.constant 1.000000e+00 : f32
    %22 = vector.broadcast %cst_12 : f32 to vector<2x32xf32>
    %23 = arith.addf %22, %21 : vector<2x32xf32>
    %24 = arith.divf %22, %23 : vector<2x32xf32>
    %25 = vector.extract_strided_slice %18 {offsets = [0, 32], sizes = [2, 32], strides = [1, 1]} : vector<2x128xf32> to vector<2x32xf32>
    %26 = arith.negf %25 : vector<2x32xf32>
    %27 = math.exp %26 : vector<2x32xf32>
    %cst_13 = arith.constant 1.000000e+00 : f32
    %28 = vector.broadcast %cst_13 : f32 to vector<2x32xf32>
    %29 = arith.addf %28, %27 : vector<2x32xf32>
    %30 = arith.divf %28, %29 : vector<2x32xf32>
    %31 = vector.extract_strided_slice %18 {offsets = [0, 64], sizes = [2, 32], strides = [1, 1]} : vector<2x128xf32> to vector<2x32xf32>
    %32 = math.tanh %31 : vector<2x32xf32>
    %33 = vector.extract_strided_slice %18 {offsets = [0, 96], sizes = [2, 32], strides = [1, 1]} : vector<2x128xf32> to vector<2x32xf32>
    %34 = arith.negf %33 : vector<2x32xf32>
    %35 = math.exp %34 : vector<2x32xf32>
    %cst_14 = arith.constant 1.000000e+00 : f32
    %36 = vector.broadcast %cst_14 : f32 to vector<2x32xf32>
    %37 = arith.addf %36, %35 : vector<2x32xf32>
    %38 = arith.divf %36, %37 : vector<2x32xf32>
    %39 = arith.mulf %30, %15 : vector<2x32xf32>
    %40 = arith.mulf %24, %32 : vector<2x32xf32>
    %41 = arith.addf %39, %40 : vector<2x32xf32>
    %42 = math.tanh %41 : vector<2x32xf32>
    %43 = arith.mulf %38, %42 : vector<2x32xf32>
    %44 = vector.extract_strided_slice %12 {offsets = [2, 0], sizes = [2, 128], strides = [1, 1]} : vector<16x128xf32> to vector<2x128xf32>
    %cst_15 = arith.constant dense<0.000000e+00> : vector<2x128xf32>
    %45 = tpu.matmul %43, %13, %cst_15 {dimension_numbers = #tpu.dot_dimension_numbers<[1], [0], [0], [1], [0, 0, 1, 1], [], []>} : vector<2x32xf32>, vector<32x128xf32>, vector<2x128xf32> -> vector<2x128xf32>
    %46 = arith.addf %44, %45 : vector<2x128xf32>
    %47 = vector.extract_strided_slice %46 {offsets = [0, 0], sizes = [2, 32], strides = [1, 1]} : vector<2x128xf32> to vector<2x32xf32>
    %48 = arith.negf %47 : vector<2x32xf32>
    %49 = math.exp %48 : vector<2x32xf32>
    %cst_16 = arith.constant 1.000000e+00 : f32
    %50 = vector.broadcast %cst_16 : f32 to vector<2x32xf32>
    %51 = arith.addf %50, %49 : vector<2x32xf32>
    %52 = arith.divf %50, %51 : vector<2x32xf32>
    %53 = vector.extract_strided_slice %46 {offsets = [0, 32], sizes = [2, 32], strides = [1, 1]} : vector<2x128xf32> to vector<2x32xf32>
    %54 = arith.negf %53 : vector<2x32xf32>
    %55 = math.exp %54 : vector<2x32xf32>
    %cst_17 = arith.constant 1.000000e+00 : f32
    %56 = vector.broadcast %cst_17 : f32 to vector<2x32xf32>
    %57 = arith.addf %56, %55 : vector<2x32xf32>
    %58 = arith.divf %56, %57 : vector<2x32xf32>
    %59 = vector.extract_strided_slice %46 {offsets = [0, 64], sizes = [2, 32], strides = [1, 1]} : vector<2x128xf32> to vector<2x32xf32>
    %60 = math.tanh %59 : vector<2x32xf32>
    %61 = vector.extract_strided_slice %46 {offsets = [0, 96], sizes = [2, 32], strides = [1, 1]} : vector<2x128xf32> to vector<2x32xf32>
    %62 = arith.negf %61 : vector<2x32xf32>
    %63 = math.exp %62 : vector<2x32xf32>
    %cst_18 = arith.constant 1.000000e+00 : f32
    %64 = vector.broadcast %cst_18 : f32 to vector<2x32xf32>
    %65 = arith.addf %64, %63 : vector<2x32xf32>
    %66 = arith.divf %64, %65 : vector<2x32xf32>
    %67 = arith.mulf %58, %41 : vector<2x32xf32>
    %68 = arith.mulf %52, %60 : vector<2x32xf32>
    %69 = arith.addf %67, %68 : vector<2x32xf32>
    %70 = math.tanh %69 : vector<2x32xf32>
    %71 = arith.mulf %66, %70 : vector<2x32xf32>
    %72 = vector.extract_strided_slice %12 {offsets = [4, 0], sizes = [2, 128], strides = [1, 1]} : vector<16x128xf32> to vector<2x128xf32>
    %cst_19 = arith.constant dense<0.000000e+00> : vector<2x128xf32>
    %73 = tpu.matmul %71, %13, %cst_19 {dimension_numbers = #tpu.dot_dimension_numbers<[1], [0], [0], [1], [0, 0, 1, 1], [], []>} : vector<2x32xf32>, vector<32x128xf32>, vector<2x128xf32> -> vector<2x128xf32>
    %74 = arith.addf %72, %73 : vector<2x128xf32>
    %75 = vector.extract_strided_slice %74 {offsets = [0, 0], sizes = [2, 32], strides = [1, 1]} : vector<2x128xf32> to vector<2x32xf32>
    %76 = arith.negf %75 : vector<2x32xf32>
    %77 = math.exp %76 : vector<2x32xf32>
    %cst_20 = arith.constant 1.000000e+00 : f32
    %78 = vector.broadcast %cst_20 : f32 to vector<2x32xf32>
    %79 = arith.addf %78, %77 : vector<2x32xf32>
    %80 = arith.divf %78, %79 : vector<2x32xf32>
    %81 = vector.extract_strided_slice %74 {offsets = [0, 32], sizes = [2, 32], strides = [1, 1]} : vector<2x128xf32> to vector<2x32xf32>
    %82 = arith.negf %81 : vector<2x32xf32>
    %83 = math.exp %82 : vector<2x32xf32>
    %cst_21 = arith.constant 1.000000e+00 : f32
    %84 = vector.broadcast %cst_21 : f32 to vector<2x32xf32>
    %85 = arith.addf %84, %83 : vector<2x32xf32>
    %86 = arith.divf %84, %85 : vector<2x32xf32>
    %87 = vector.extract_strided_slice %74 {offsets = [0, 64], sizes = [2, 32], strides = [1, 1]} : vector<2x128xf32> to vector<2x32xf32>
    %88 = math.tanh %87 : vector<2x32xf32>
    %89 = vector.extract_strided_slice %74 {offsets = [0, 96], sizes = [2, 32], strides = [1, 1]} : vector<2x128xf32> to vector<2x32xf32>
    %90 = arith.negf %89 : vector<2x32xf32>
    %91 = math.exp %90 : vector<2x32xf32>
    %cst_22 = arith.constant 1.000000e+00 : f32
    %92 = vector.broadcast %cst_22 : f32 to vector<2x32xf32>
    %93 = arith.addf %92, %91 : vector<2x32xf32>
    %94 = arith.divf %92, %93 : vector<2x32xf32>
    %95 = arith.mulf %86, %69 : vector<2x32xf32>
    %96 = arith.mulf %80, %88 : vector<2x32xf32>
    %97 = arith.addf %95, %96 : vector<2x32xf32>
    %98 = math.tanh %97 : vector<2x32xf32>
    %99 = arith.mulf %94, %98 : vector<2x32xf32>
    %100 = vector.extract_strided_slice %12 {offsets = [6, 0], sizes = [2, 128], strides = [1, 1]} : vector<16x128xf32> to vector<2x128xf32>
    %cst_23 = arith.constant dense<0.000000e+00> : vector<2x128xf32>
    %101 = tpu.matmul %99, %13, %cst_23 {dimension_numbers = #tpu.dot_dimension_numbers<[1], [0], [0], [1], [0, 0, 1, 1], [], []>} : vector<2x32xf32>, vector<32x128xf32>, vector<2x128xf32> -> vector<2x128xf32>
    %102 = arith.addf %100, %101 : vector<2x128xf32>
    %103 = vector.extract_strided_slice %102 {offsets = [0, 0], sizes = [2, 32], strides = [1, 1]} : vector<2x128xf32> to vector<2x32xf32>
    %104 = arith.negf %103 : vector<2x32xf32>
    %105 = math.exp %104 : vector<2x32xf32>
    %cst_24 = arith.constant 1.000000e+00 : f32
    %106 = vector.broadcast %cst_24 : f32 to vector<2x32xf32>
    %107 = arith.addf %106, %105 : vector<2x32xf32>
    %108 = arith.divf %106, %107 : vector<2x32xf32>
    %109 = vector.extract_strided_slice %102 {offsets = [0, 32], sizes = [2, 32], strides = [1, 1]} : vector<2x128xf32> to vector<2x32xf32>
    %110 = arith.negf %109 : vector<2x32xf32>
    %111 = math.exp %110 : vector<2x32xf32>
    %cst_25 = arith.constant 1.000000e+00 : f32
    %112 = vector.broadcast %cst_25 : f32 to vector<2x32xf32>
    %113 = arith.addf %112, %111 : vector<2x32xf32>
    %114 = arith.divf %112, %113 : vector<2x32xf32>
    %115 = vector.extract_strided_slice %102 {offsets = [0, 64], sizes = [2, 32], strides = [1, 1]} : vector<2x128xf32> to vector<2x32xf32>
    %116 = math.tanh %115 : vector<2x32xf32>
    %117 = vector.extract_strided_slice %102 {offsets = [0, 96], sizes = [2, 32], strides = [1, 1]} : vector<2x128xf32> to vector<2x32xf32>
    %118 = arith.negf %117 : vector<2x32xf32>
    %119 = math.exp %118 : vector<2x32xf32>
    %cst_26 = arith.constant 1.000000e+00 : f32
    %120 = vector.broadcast %cst_26 : f32 to vector<2x32xf32>
    %121 = arith.addf %120, %119 : vector<2x32xf32>
    %122 = arith.divf %120, %121 : vector<2x32xf32>
    %123 = arith.mulf %114, %97 : vector<2x32xf32>
    %124 = arith.mulf %108, %116 : vector<2x32xf32>
    %125 = arith.addf %123, %124 : vector<2x32xf32>
    %126 = math.tanh %125 : vector<2x32xf32>
    %127 = arith.mulf %122, %126 : vector<2x32xf32>
    %128 = vector.extract_strided_slice %12 {offsets = [8, 0], sizes = [2, 128], strides = [1, 1]} : vector<16x128xf32> to vector<2x128xf32>
    %cst_27 = arith.constant dense<0.000000e+00> : vector<2x128xf32>
    %129 = tpu.matmul %127, %13, %cst_27 {dimension_numbers = #tpu.dot_dimension_numbers<[1], [0], [0], [1], [0, 0, 1, 1], [], []>} : vector<2x32xf32>, vector<32x128xf32>, vector<2x128xf32> -> vector<2x128xf32>
    %130 = arith.addf %128, %129 : vector<2x128xf32>
    %131 = vector.extract_strided_slice %130 {offsets = [0, 0], sizes = [2, 32], strides = [1, 1]} : vector<2x128xf32> to vector<2x32xf32>
    %132 = arith.negf %131 : vector<2x32xf32>
    %133 = math.exp %132 : vector<2x32xf32>
    %cst_28 = arith.constant 1.000000e+00 : f32
    %134 = vector.broadcast %cst_28 : f32 to vector<2x32xf32>
    %135 = arith.addf %134, %133 : vector<2x32xf32>
    %136 = arith.divf %134, %135 : vector<2x32xf32>
    %137 = vector.extract_strided_slice %130 {offsets = [0, 32], sizes = [2, 32], strides = [1, 1]} : vector<2x128xf32> to vector<2x32xf32>
    %138 = arith.negf %137 : vector<2x32xf32>
    %139 = math.exp %138 : vector<2x32xf32>
    %cst_29 = arith.constant 1.000000e+00 : f32
    %140 = vector.broadcast %cst_29 : f32 to vector<2x32xf32>
    %141 = arith.addf %140, %139 : vector<2x32xf32>
    %142 = arith.divf %140, %141 : vector<2x32xf32>
    %143 = vector.extract_strided_slice %130 {offsets = [0, 64], sizes = [2, 32], strides = [1, 1]} : vector<2x128xf32> to vector<2x32xf32>
    %144 = math.tanh %143 : vector<2x32xf32>
    %145 = vector.extract_strided_slice %130 {offsets = [0, 96], sizes = [2, 32], strides = [1, 1]} : vector<2x128xf32> to vector<2x32xf32>
    %146 = arith.negf %145 : vector<2x32xf32>
    %147 = math.exp %146 : vector<2x32xf32>
    %cst_30 = arith.constant 1.000000e+00 : f32
    %148 = vector.broadcast %cst_30 : f32 to vector<2x32xf32>
    %149 = arith.addf %148, %147 : vector<2x32xf32>
    %150 = arith.divf %148, %149 : vector<2x32xf32>
    %151 = arith.mulf %142, %125 : vector<2x32xf32>
    %152 = arith.mulf %136, %144 : vector<2x32xf32>
    %153 = arith.addf %151, %152 : vector<2x32xf32>
    %154 = math.tanh %153 : vector<2x32xf32>
    %155 = arith.mulf %150, %154 : vector<2x32xf32>
    %156 = vector.extract_strided_slice %12 {offsets = [10, 0], sizes = [2, 128], strides = [1, 1]} : vector<16x128xf32> to vector<2x128xf32>
    %cst_31 = arith.constant dense<0.000000e+00> : vector<2x128xf32>
    %157 = tpu.matmul %155, %13, %cst_31 {dimension_numbers = #tpu.dot_dimension_numbers<[1], [0], [0], [1], [0, 0, 1, 1], [], []>} : vector<2x32xf32>, vector<32x128xf32>, vector<2x128xf32> -> vector<2x128xf32>
    %158 = arith.addf %156, %157 : vector<2x128xf32>
    %159 = vector.extract_strided_slice %158 {offsets = [0, 0], sizes = [2, 32], strides = [1, 1]} : vector<2x128xf32> to vector<2x32xf32>
    %160 = arith.negf %159 : vector<2x32xf32>
    %161 = math.exp %160 : vector<2x32xf32>
    %cst_32 = arith.constant 1.000000e+00 : f32
    %162 = vector.broadcast %cst_32 : f32 to vector<2x32xf32>
    %163 = arith.addf %162, %161 : vector<2x32xf32>
    %164 = arith.divf %162, %163 : vector<2x32xf32>
    %165 = vector.extract_strided_slice %158 {offsets = [0, 32], sizes = [2, 32], strides = [1, 1]} : vector<2x128xf32> to vector<2x32xf32>
    %166 = arith.negf %165 : vector<2x32xf32>
    %167 = math.exp %166 : vector<2x32xf32>
    %cst_33 = arith.constant 1.000000e+00 : f32
    %168 = vector.broadcast %cst_33 : f32 to vector<2x32xf32>
    %169 = arith.addf %168, %167 : vector<2x32xf32>
    %170 = arith.divf %168, %169 : vector<2x32xf32>
    %171 = vector.extract_strided_slice %158 {offsets = [0, 64], sizes = [2, 32], strides = [1, 1]} : vector<2x128xf32> to vector<2x32xf32>
    %172 = math.tanh %171 : vector<2x32xf32>
    %173 = vector.extract_strided_slice %158 {offsets = [0, 96], sizes = [2, 32], strides = [1, 1]} : vector<2x128xf32> to vector<2x32xf32>
    %174 = arith.negf %173 : vector<2x32xf32>
    %175 = math.exp %174 : vector<2x32xf32>
    %cst_34 = arith.constant 1.000000e+00 : f32
    %176 = vector.broadcast %cst_34 : f32 to vector<2x32xf32>
    %177 = arith.addf %176, %175 : vector<2x32xf32>
    %178 = arith.divf %176, %177 : vector<2x32xf32>
    %179 = arith.mulf %170, %153 : vector<2x32xf32>
    %180 = arith.mulf %164, %172 : vector<2x32xf32>
    %181 = arith.addf %179, %180 : vector<2x32xf32>
    %182 = math.tanh %181 : vector<2x32xf32>
    %183 = arith.mulf %178, %182 : vector<2x32xf32>
    %184 = vector.extract_strided_slice %12 {offsets = [12, 0], sizes = [2, 128], strides = [1, 1]} : vector<16x128xf32> to vector<2x128xf32>
    %cst_35 = arith.constant dense<0.000000e+00> : vector<2x128xf32>
    %185 = tpu.matmul %183, %13, %cst_35 {dimension_numbers = #tpu.dot_dimension_numbers<[1], [0], [0], [1], [0, 0, 1, 1], [], []>} : vector<2x32xf32>, vector<32x128xf32>, vector<2x128xf32> -> vector<2x128xf32>
    %186 = arith.addf %184, %185 : vector<2x128xf32>
    %187 = vector.extract_strided_slice %186 {offsets = [0, 0], sizes = [2, 32], strides = [1, 1]} : vector<2x128xf32> to vector<2x32xf32>
    %188 = arith.negf %187 : vector<2x32xf32>
    %189 = math.exp %188 : vector<2x32xf32>
    %cst_36 = arith.constant 1.000000e+00 : f32
    %190 = vector.broadcast %cst_36 : f32 to vector<2x32xf32>
    %191 = arith.addf %190, %189 : vector<2x32xf32>
    %192 = arith.divf %190, %191 : vector<2x32xf32>
    %193 = vector.extract_strided_slice %186 {offsets = [0, 32], sizes = [2, 32], strides = [1, 1]} : vector<2x128xf32> to vector<2x32xf32>
    %194 = arith.negf %193 : vector<2x32xf32>
    %195 = math.exp %194 : vector<2x32xf32>
    %cst_37 = arith.constant 1.000000e+00 : f32
    %196 = vector.broadcast %cst_37 : f32 to vector<2x32xf32>
    %197 = arith.addf %196, %195 : vector<2x32xf32>
    %198 = arith.divf %196, %197 : vector<2x32xf32>
    %199 = vector.extract_strided_slice %186 {offsets = [0, 64], sizes = [2, 32], strides = [1, 1]} : vector<2x128xf32> to vector<2x32xf32>
    %200 = math.tanh %199 : vector<2x32xf32>
    %201 = vector.extract_strided_slice %186 {offsets = [0, 96], sizes = [2, 32], strides = [1, 1]} : vector<2x128xf32> to vector<2x32xf32>
    %202 = arith.negf %201 : vector<2x32xf32>
    %203 = math.exp %202 : vector<2x32xf32>
    %cst_38 = arith.constant 1.000000e+00 : f32
    %204 = vector.broadcast %cst_38 : f32 to vector<2x32xf32>
    %205 = arith.addf %204, %203 : vector<2x32xf32>
    %206 = arith.divf %204, %205 : vector<2x32xf32>
    %207 = arith.mulf %198, %181 : vector<2x32xf32>
    %208 = arith.mulf %192, %200 : vector<2x32xf32>
    %209 = arith.addf %207, %208 : vector<2x32xf32>
    %210 = math.tanh %209 : vector<2x32xf32>
    %211 = arith.mulf %206, %210 : vector<2x32xf32>
    %212 = vector.extract_strided_slice %12 {offsets = [14, 0], sizes = [2, 128], strides = [1, 1]} : vector<16x128xf32> to vector<2x128xf32>
    %cst_39 = arith.constant dense<0.000000e+00> : vector<2x128xf32>
    %213 = tpu.matmul %211, %13, %cst_39 {dimension_numbers = #tpu.dot_dimension_numbers<[1], [0], [0], [1], [0, 0, 1, 1], [], []>} : vector<2x32xf32>, vector<32x128xf32>, vector<2x128xf32> -> vector<2x128xf32>
    %214 = arith.addf %212, %213 : vector<2x128xf32>
    %215 = vector.extract_strided_slice %214 {offsets = [0, 0], sizes = [2, 32], strides = [1, 1]} : vector<2x128xf32> to vector<2x32xf32>
    %216 = arith.negf %215 : vector<2x32xf32>
    %217 = math.exp %216 : vector<2x32xf32>
    %cst_40 = arith.constant 1.000000e+00 : f32
    %218 = vector.broadcast %cst_40 : f32 to vector<2x32xf32>
    %219 = arith.addf %218, %217 : vector<2x32xf32>
    %220 = arith.divf %218, %219 : vector<2x32xf32>
    %221 = vector.extract_strided_slice %214 {offsets = [0, 32], sizes = [2, 32], strides = [1, 1]} : vector<2x128xf32> to vector<2x32xf32>
    %222 = arith.negf %221 : vector<2x32xf32>
    %223 = math.exp %222 : vector<2x32xf32>
    %cst_41 = arith.constant 1.000000e+00 : f32
    %224 = vector.broadcast %cst_41 : f32 to vector<2x32xf32>
    %225 = arith.addf %224, %223 : vector<2x32xf32>
    %226 = arith.divf %224, %225 : vector<2x32xf32>
    %227 = vector.extract_strided_slice %214 {offsets = [0, 64], sizes = [2, 32], strides = [1, 1]} : vector<2x128xf32> to vector<2x32xf32>
    %228 = math.tanh %227 : vector<2x32xf32>
    %229 = vector.extract_strided_slice %214 {offsets = [0, 96], sizes = [2, 32], strides = [1, 1]} : vector<2x128xf32> to vector<2x32xf32>
    %230 = arith.negf %229 : vector<2x32xf32>
    %231 = math.exp %230 : vector<2x32xf32>
    %cst_42 = arith.constant 1.000000e+00 : f32
    %232 = vector.broadcast %cst_42 : f32 to vector<2x32xf32>
    %233 = arith.addf %232, %231 : vector<2x32xf32>
    %234 = arith.divf %232, %233 : vector<2x32xf32>
    %235 = arith.mulf %226, %209 : vector<2x32xf32>
    %236 = arith.mulf %220, %228 : vector<2x32xf32>
    %237 = arith.addf %235, %236 : vector<2x32xf32>
    %238 = math.tanh %237 : vector<2x32xf32>
    %239 = arith.mulf %234, %238 : vector<2x32xf32>
    %240 = tpu.concatenate %43, %71, %99, %127, %155, %183, %211, %239 in 1 : vector<2x32xf32>, vector<2x32xf32>, vector<2x32xf32>, vector<2x32xf32>, vector<2x32xf32>, vector<2x32xf32>, vector<2x32xf32>, vector<2x32xf32> -> vector<2x256xf32>
    %c0_43 = arith.constant 0 : index
    %c0_44 = arith.constant 0 : index
    %241 = vector.load %arg2[%c0_43, %c0_44] : memref<2x256xf32, #tpu.memory_space<vmem>>, vector<2x256xf32>
    tpu.vector_store %arg2[%c0_43, %c0_44], %240 {strides = array<i32>} : memref<2x256xf32, #tpu.memory_space<vmem>>, vector<2x256xf32>,
    return
  }
}

</mosaic_0001>

<llo_original>
// kernel: tpu_custom_call.1
$region0: #{tpu_custom_call.1}
  #allocation0 [shape = 'u32[]', space=smem, size = 0x4, offset = 0x4, fixed_abs, tag = 'smem constant byte address 0x4 - core index']
  #allocation1 [shape = 'u32[144,128]{1,0:T(1,128)}', space=vmem, size = 0x12000, scoped, tag = 'internal scratch']
  %s0 = inlined_call_operand.hbm [shape: f32[16,16], index: 0, kind: input, shape index: {}]
  %s1 = inlined_call_operand.hbm [shape: f32[96,128], index: 1, kind: input, shape index: {}]
  %s2 = inlined_call_operand.hbm [shape: f32[2,256], index: 2, kind: output, shape index: {}]
  %s3 = sld [smem:[#allocation0]]
  $region26: #{tpu_custom_call.1} parent=0
    _
  %s5 = ssub.s32 1, %s3
  %s6 = scalar_select 0, %s5, %s3
  $region1: #{tpu_custom_call.1} parent=0
    #allocation2 [shape = 'u8[8192]{0}', space=vmem, size = 0x2000, scoped, tag = 'input window, operand 0, single buffered']
    #allocation3 [shape = 's32[1]{0}', space=sflag, size = 0x4, scoped, tag = 'scoped memory for tpu_custom_call.1']
    #allocation4 [shape = 's32[1]{0}', space=sflag, size = 0x4, scoped, tag = 'scoped memory for tpu_custom_call.1']
    #allocation5 [shape = 'u8[49152]{0}', space=vmem, size = 0xc000, scoped, tag = 'input window, operand 1, single buffered']
    #allocation6 [shape = 's32[1]{0}', space=sflag, size = 0x4, scoped, tag = 'scoped memory for tpu_custom_call.1']
    #allocation7 [shape = 'u8[2048]{0}', space=vmem, size = 0x800, scoped, tag = 'output window, operand 0, single buffered']
    %7 = vsyncpa [#allocation3], 0
    %8 = vsyncpa [#allocation6], 0
    %9 = vsyncpa [#allocation4], 0
    // Predicated region
    $region2: #{tpu_custom_call.1} parent=1 // pred_check
      _
    $region3: #{tpu_custom_call.1} parent=1 // pred_check_branch
      %11 = sbr.rel (0) target = $region5
    $region4: #{tpu_custom_call.1} parent=1 // pred_region
      %s13 = ssub.s32 256, 256
      %14 = vsyncadd [#allocation3], %s13
      %s15 = sshll.u32 [#allocation2], 4
      %s16 = int_to_ptr.vmem [resolvable:$true] %s15
      %21 = dma.hbm_to_vmem [thread:$0]  %s0, 256, %s16, [#allocation3], 128, 128, 8
    $region5: #{tpu_custom_call.1} parent=1 // pred_fallthru
      _
    // Predicated region
    $region6: #{tpu_custom_call.1} parent=1 // pred_check
      _
    $region7: #{tpu_custom_call.1} parent=1 // pred_check_branch
      %23 = sbr.rel (0) target = $region9
    $region8: #{tpu_custom_call.1} parent=1 // pred_region
      %s25 = ssub.s32 1536, 1536
      %26 = vsyncadd [#allocation6], %s25
      %s27 = sshll.u32 [#allocation5], 4
      %s28 = int_to_ptr.vmem [resolvable:$true] %s27
      %33 = dma.hbm_to_vmem [thread:$0]  %s1, 1536, %s28, [#allocation6], 128, 128, 8
    $region9: #{tpu_custom_call.1} parent=1 // pred_fallthru
      _
    // Predicated region
    $region10: #{tpu_custom_call.1} parent=1 // pred_check
      _
    $region11: #{tpu_custom_call.1} parent=1 // pred_check_branch
      %35 = sbr.rel (0) target = $region13
    $region12: #{tpu_custom_call.1} parent=1 // pred_region
      %36 = dma.done [#allocation3], 256
    $region13: #{tpu_custom_call.1} parent=1 // pred_fallthru
      _
    // Predicated region
    $region14: #{tpu_custom_call.1} parent=1 // pred_check
      _
    $region15: #{tpu_custom_call.1} parent=1 // pred_check_branch
      %38 = sbr.rel (0) target = $region17
    $region16: #{tpu_custom_call.1} parent=1 // pred_region
      %39 = dma.done [#allocation6], 1536
    $region17: #{tpu_custom_call.1} parent=1 // pred_fallthru
      _
    %v40 = vld [vmem:[#allocation2] sm:$0xff]
    %v41 = vld [vmem:[#allocation2 + $0x8] sm:$0xff]
    %v42 = vld [vmem:[#allocation5] sm:$0xff]
    %v43 = vld [vmem:[#allocation5 + $0x8] sm:$0xff]
    %v44 = vld [vmem:[#allocation5 + $0x10] sm:$0x1]
    %v45 = vlaneseq
    %v46 = vshrl.u32 %v45, 7
    %v47 = vsub.s32 0, %v46
    %v48 = vrot.slane %v44, %v47
    %vm49 = vcmask 130048
    %v51 = vsel %vm49, %v40, 0
    %v54 = vsel %vm49, %v41, 0
    %56 = vmatprep.subr.mxu0 0.0
    %57 = vmatpush1.msra.mxu0 %v42
    %58 = vmatprep.subr.mxu0 0.0
    %59 = vmatpush1.msra.mxu0 %v43
    %60 = vmatprep.subr.mxu0 0.0
    %61 = vmatpush1.msra.mxu0 0.0
    %62 = vmatprep.subr.mxu0 0.0
    %63 = vmatpush1.msra.mxu0 0.0
    %64 = vmatprep.subr.mxu0 0.0
    %65 = vmatpush1.msra.mxu0 0.0
    %66 = vmatprep.subr.mxu0 0.0
    %67 = vmatpush1.msra.mxu0 0.0
    %68 = vmatprep.subr.mxu0 0.0
    %69 = vmatpush1.msra.mxu0 0.0
    %70 = vmatprep.subr.mxu0 0.0
    %71 = vmatpush1.msra.mxu0 0.0
    %72 = vmatprep.subr.mxu0 0.0
    %73 = vmatpush1.msra.mxu0 0.0
    %74 = vmatprep.subr.mxu0 0.0
    %75 = vmatpush1.msra.mxu0 0.0
    %76 = vmatprep.subr.mxu0 0.0
    %77 = vmatpush1.msra.mxu0 0.0
    %78 = vmatprep.subr.mxu0 0.0
    %79 = vmatpush1.msra.mxu0 0.0
    %80 = vmatprep.subr.mxu0 0.0
    %81 = vmatpush1.msra.mxu0 0.0
    %82 = vmatprep.subr.mxu0 0.0
    %83 = vmatpush1.msra.mxu0 0.0
    %84 = vmatprep.subr.mxu0 0.0
    %85 = vmatpush1.msra.mxu0 0.0
    %86 = vmatprep.subr.mxu0 0.0
    %87 = vmatpush1.msra.mxu0 0.0
    %88 = vmatprep.subr.mxu0 0.0
    %89 = vmatpush1.msra.mxu0 0.0
    %90 = vmatprep.subr.mxu0 0.0
    %91 = vmatpush1.msra.mxu0 0.0
    %92 = vmatprep.subr.mxu0 0.0
    %93 = vmatpush1.msra.mxu0 0.0
    %94 = vmatprep.subr.mxu0 0.0
    %95 = vmatpush1.msra.mxu0 0.0
    %96 = vmatprep.subr.mxu0 0.0
    %97 = vmatpush1.msra.mxu0 0.0
    %98 = vmatprep.subr.mxu0 0.0
    %99 = vmatpush1.msra.mxu0 0.0
    %100 = vmatprep.subr.mxu0 0.0
    %101 = vmatpush1.msra.mxu0 0.0
    %102 = vmatprep.subr.mxu0 0.0
    %103 = vmatpush1.msra.mxu0 0.0
    %104 = vmatprep.subr.mxu0 0.0
    %105 = vmatpush1.msra.mxu0 0.0
    %106 = vmatprep.subr.mxu0 0.0
    %107 = vmatpush1.msra.mxu0 0.0
    %108 = vmatprep.subr.mxu0 0.0
    %109 = vmatpush1.msra.mxu0 0.0
    %110 = vmatprep.subr.mxu0 0.0
    %111 = vmatpush1.msra.mxu0 0.0
    %112 = vmatprep.subr.mxu0 0.0
    %113 = vmatpush1.msra.mxu0 0.0
    %114 = vmatprep.subr.mxu0 0.0
    %115 = vmatpush1.msra.mxu0 0.0
    %116 = vmatprep.subr.mxu0 0.0
    %117 = vmatpush1.msra.mxu0 0.0
    %118 = vmatprep.subr.mxu0 0.0
    %119 = vmatpush1.msra.mxu0 0.0
    %120 = vmatprep.mubr.f32.mxu0 0.0
    %121 = vmatmul.mubr.f32.gmra.mrb[0].mxu0 %v51
    %v122 = vpop.f32.mrb[0].mxu0
    %v123 = vadd.f32 %v48, %v122
    %v124 = vpop.f32.mrb[0].mxu0
    %125 = vmatprep.mubr.f32.mxu0 0.0
    %126 = vmatmul.mubr.f32.gmra.mrb[0].mxu0 %v54
    %v127 = vpop.f32.mrb[0].mxu0
    %v128 = vadd.f32 %v48, %v127
    %v129 = vpop.f32.mrb[0].mxu0
    %130 = vdwg.mxu0
    %v131 = vmax.f32 %v123, 0.0
    %v132 = vmax.f32 %v128, 0.0
    %v133 = vld [vmem:[#allocation5 + $0x18] sm:$0xff]
    %v134 = vld [vmem:[#allocation5 + $0x20] sm:$0xff]
    %v135 = vld [vmem:[#allocation5 + $0x28] sm:$0xff]
    %v136 = vld [vmem:[#allocation5 + $0x30] sm:$0xff]
    %v137 = vld [vmem:[#allocation5 + $0x38] sm:$0x1]
    %v138 = vlaneseq
    %v139 = vshrl.u32 %v138, 7
    %v140 = vsub.s32 0, %v139
    %v141 = vrot.slane %v137, %v140
    %vm142 = vcmask 261120
    %v144 = vsel %vm142, %v131, 0
    %v147 = vsel %vm142, %v132, 0
    %149 = vmatprep.subr.mxu0 0.0
    %150 = vmatpush1.msra.mxu0 %v133
    %151 = vmatprep.subr.mxu0 0.0
    %152 = vmatpush1.msra.mxu0 %v134
    %153 = vmatprep.subr.mxu0 0.0
    %154 = vmatpush1.msra.mxu0 %v135
    %155 = vmatprep.subr.mxu0 0.0
    %156 = vmatpush1.msra.mxu0 %v136
    %157 = vmatprep.subr.mxu0 0.0
    %158 = vmatpush1.msra.mxu0 0.0
    %159 = vmatprep.subr.mxu0 0.0
    %160 = vmatpush1.msra.mxu0 0.0
    %161 = vmatprep.subr.mxu0 0.0
    %162 = vmatpush1.msra.mxu0 0.0
    %163 = vmatprep.subr.mxu0 0.0
    %164 = vmatpush1.msra.mxu0 0.0
    %165 = vmatprep.subr.mxu0 0.0
    %166 = vmatpush1.msra.mxu0 0.0
    %167 = vmatprep.subr.mxu0 0.0
    %168 = vmatpush1.msra.mxu0 0.0
    %169 = vmatprep.subr.mxu0 0.0
    %170 = vmatpush1.msra.mxu0 0.0
    %171 = vmatprep.subr.mxu0 0.0
    %172 = vmatpush1.msra.mxu0 0.0
    %173 = vmatprep.subr.mxu0 0.0
    %174 = vmatpush1.msra.mxu0 0.0
    %175 = vmatprep.subr.mxu0 0.0
    %176 = vmatpush1.msra.mxu0 0.0
    %177 = vmatprep.subr.mxu0 0.0
    %178 = vmatpush1.msra.mxu0 0.0
    %179 = vmatprep.subr.mxu0 0.0
    %180 = vmatpush1.msra.mxu0 0.0
    %181 = vmatprep.subr.mxu0 0.0
    %182 = vmatpush1.msra.mxu0 0.0
    %183 = vmatprep.subr.mxu0 0.0
    %184 = vmatpush1.msra.mxu0 0.0
    %185 = vmatprep.subr.mxu0 0.0
    %186 = vmatpush1.msra.mxu0 0.0
    %187 = vmatprep.subr.mxu0 0.0
    %188 = vmatpush1.msra.mxu0 0.0
    %189 = vmatprep.subr.mxu0 0.0
    %190 = vmatpush1.msra.mxu0 0.0
    %191 = vmatprep.subr.mxu0 0.0
    %192 = vmatpush1.msra.mxu0 0.0
    %193 = vmatprep.subr.mxu0 0.0
    %194 = vmatpush1.msra.mxu0 0.0
    %195 = vmatprep.subr.mxu0 0.0
    %196 = vmatpush1.msra.mxu0 0.0
    %197 = vmatprep.subr.mxu0 0.0
    %198 = vmatpush1.msra.mxu0 0.0
    %199 = vmatprep.subr.mxu0 0.0
    %200 = vmatpush1.msra.mxu0 0.0
    %201 = vmatprep.subr.mxu0 0.0
    %202 = vmatpush1.msra.mxu0 0.0
    %203 = vmatprep.subr.mxu0 0.0
    %204 = vmatpush1.msra.mxu0 0.0
    %205 = vmatprep.subr.mxu0 0.0
    %206 = vmatpush1.msra.mxu0 0.0
    %207 = vmatprep.subr.mxu0 0.0
    %208 = vmatpush1.msra.mxu0 0.0
    %209 = vmatprep.subr.mxu0 0.0
    %210 = vmatpush1.msra.mxu0 0.0
    %211 = vmatprep.subr.mxu0 0.0
    %212 = vmatpush1.msra.mxu0 0.0
    %213 = vmatprep.mubr.f32.mxu0 0.0
    %214 = vmatmul.mubr.f32.gmra.mrb[0].mxu0 %v144
    %v215 = vpop.f32.mrb[0].mxu0
    %v216 = vadd.f32 %v141, %v215
    %v217 = vpop.f32.mrb[0].mxu0
    %218 = vmatprep.mubr.f32.mxu0 0.0
    %219 = vmatmul.mubr.f32.gmra.mrb[0].mxu0 %v147
    %v220 = vpop.f32.mrb[0].mxu0
    %v221 = vadd.f32 %v141, %v220
    %v222 = vpop.f32.mrb[0].mxu0
    %223 = vdwg.mxu0
    %v224 = vld [vmem:[#allocation5 + $0x40] sm:$0xff]
    %v225 = vld [vmem:[#allocation5 + $0x48] sm:$0xff]
    %v226 = vld [vmem:[#allocation5 + $0x50] sm:$0xff]
    %v227 = vld [vmem:[#allocation5 + $0x58] sm:$0xff]
    %v229 = vsel %vm142, 0.0, 0
    %231 = vmatprep.subr.mxu0 0.0
    %232 = vmatpush1.msra.mxu0 %v224
    %233 = vmatprep.subr.mxu0 0.0
    %234 = vmatpush1.msra.mxu0 %v225
    %235 = vmatprep.subr.mxu0 0.0
    %236 = vmatpush1.msra.mxu0 %v226
    %237 = vmatprep.subr.mxu0 0.0
    %238 = vmatpush1.msra.mxu0 %v227
    %239 = vmatprep.subr.mxu0 0.0
    %240 = vmatpush1.msra.mxu0 0.0
    %241 = vmatprep.subr.mxu0 0.0
    %242 = vmatpush1.msra.mxu0 0.0
    %243 = vmatprep.subr.mxu0 0.0
    %244 = vmatpush1.msra.mxu0 0.0
    %245 = vmatprep.subr.mxu0 0.0
    %246 = vmatpush1.msra.mxu0 0.0
    %247 = vmatprep.subr.mxu0 0.0
    %248 = vmatpush1.msra.mxu0 0.0
    %249 = vmatprep.subr.mxu0 0.0
    %250 = vmatpush1.msra.mxu0 0.0
    %251 = vmatprep.subr.mxu0 0.0
    %252 = vmatpush1.msra.mxu0 0.0
    %253 = vmatprep.subr.mxu0 0.0
    %254 = vmatpush1.msra.mxu0 0.0
    %255 = vmatprep.subr.mxu0 0.0
    %256 = vmatpush1.msra.mxu0 0.0
    %257 = vmatprep.subr.mxu0 0.0
    %258 = vmatpush1.msra.mxu0 0.0
    %259 = vmatprep.subr.mxu0 0.0
    %260 = vmatpush1.msra.mxu0 0.0
    %261 = vmatprep.subr.mxu0 0.0
    %262 = vmatpush1.msra.mxu0 0.0
    %263 = vmatprep.subr.mxu0 0.0
    %264 = vmatpush1.msra.mxu0 0.0
    %265 = vmatprep.subr.mxu0 0.0
    %266 = vmatpush1.msra.mxu0 0.0
    %267 = vmatprep.subr.mxu0 0.0
    %268 = vmatpush1.msra.mxu0 0.0
    %269 = vmatprep.subr.mxu0 0.0
    %270 = vmatpush1.msra.mxu0 0.0
    %271 = vmatprep.subr.mxu0 0.0
    %272 = vmatpush1.msra.mxu0 0.0
    %273 = vmatprep.subr.mxu0 0.0
    %274 = vmatpush1.msra.mxu0 0.0
    %275 = vmatprep.subr.mxu0 0.0
    %276 = vmatpush1.msra.mxu0 0.0
    %277 = vmatprep.subr.mxu0 0.0
    %278 = vmatpush1.msra.mxu0 0.0
    %279 = vmatprep.subr.mxu0 0.0
    %280 = vmatpush1.msra.mxu0 0.0
    %281 = vmatprep.subr.mxu0 0.0
    %282 = vmatpush1.msra.mxu0 0.0
    %283 = vmatprep.subr.mxu0 0.0
    %284 = vmatpush1.msra.mxu0 0.0
    %285 = vmatprep.subr.mxu0 0.0
    %286 = vmatpush1.msra.mxu0 0.0
    %287 = vmatprep.subr.mxu0 0.0
    %288 = vmatpush1.msra.mxu0 0.0
    %289 = vmatprep.subr.mxu0 0.0
    %290 = vmatpush1.msra.mxu0 0.0
    %291 = vmatprep.subr.mxu0 0.0
    %292 = vmatpush1.msra.mxu0 0.0
    %293 = vmatprep.subr.mxu0 0.0
    %294 = vmatpush1.msra.mxu0 0.0
    %295 = vmatprep.mubr.f32.mxu0 0.0
    %296 = vmatmul.mubr.f32.gmra.mrb[0].mxu0 %v229
    %v297 = vpop.f32.mrb[0].mxu0
    %v298 = vadd.f32 0.0, %v297
    %v299 = vpop.f32.mrb[0].mxu0
    %300 = vdwg.mxu0
    %v301 = vadd.f32 %v216, %v298
    %v302 = vxor.u32 %v301, 2147483648
    %v303 = vmul.f32 %v302, 1.442695
    %v304 = vpow.pop %v303
    %v305 = vadd.f32 %v304, 1.0
    %v306 = vrcp.pop %v305
    %v307 = vmul.f32 1.0, %v306
    %v308 = vtanh.pop %v301
    %v309 = vmul.f32 %v307, 0.0
    %311 = vrot.lane.b32.xlu0 %v308, 64
    %v312 = vpop.permute.xlu0 %311
    %v314 = vmul.f32 %v307, %v312
    %316 = vrot.lane.b32.xlu0 %v314, 32
    %v317 = vpop.permute.xlu0 %316
    %v319 = vadd.f32 %v309, %v317
    %v320 = vtanh.pop %v319
    %322 = vrot.lane.b32.xlu0 %v320, 64
    %v323 = vpop.permute.xlu0 %322
    %v325 = vmul.f32 %v307, %v323
    %327 = vrot.lane.b32.xlu0 %v325, 32
    %v328 = vpop.permute.xlu0 %327
    %v329 = vsel %vm142, %v328, 0
    %331 = vmatprep.subr.mxu0 0.0
    %332 = vmatpush1.msra.mxu0 %v224
    %333 = vmatprep.subr.mxu0 0.0
    %334 = vmatpush1.msra.mxu0 %v225
    %335 = vmatprep.subr.mxu0 0.0
    %336 = vmatpush1.msra.mxu0 %v226
    %337 = vmatprep.subr.mxu0 0.0
    %338 = vmatpush1.msra.mxu0 %v227
    %339 = vmatprep.subr.mxu0 0.0
    %340 = vmatpush1.msra.mxu0 0.0
    %341 = vmatprep.subr.mxu0 0.0
    %342 = vmatpush1.msra.mxu0 0.0
    %343 = vmatprep.subr.mxu0 0.0
    %344 = vmatpush1.msra.mxu0 0.0
    %345 = vmatprep.subr.mxu0 0.0
    %346 = vmatpush1.msra.mxu0 0.0
    %347 = vmatprep.subr.mxu0 0.0
    %348 = vmatpush1.msra.mxu0 0.0
    %349 = vmatprep.subr.mxu0 0.0
    %350 = vmatpush1.msra.mxu0 0.0
    %351 = vmatprep.subr.mxu0 0.0
    %352 = vmatpush1.msra.mxu0 0.0
    %353 = vmatprep.subr.mxu0 0.0
    %354 = vmatpush1.msra.mxu0 0.0
    %355 = vmatprep.subr.mxu0 0.0
    %356 = vmatpush1.msra.mxu0 0.0
    %357 = vmatprep.subr.mxu0 0.0
    %358 = vmatpush1.msra.mxu0 0.0
    %359 = vmatprep.subr.mxu0 0.0
    %360 = vmatpush1.msra.mxu0 0.0
    %361 = vmatprep.subr.mxu0 0.0
    %362 = vmatpush1.msra.mxu0 0.0
    %363 = vmatprep.subr.mxu0 0.0
    %364 = vmatpush1.msra.mxu0 0.0
    %365 = vmatprep.subr.mxu0 0.0
    %366 = vmatpush1.msra.mxu0 0.0
    %367 = vmatprep.subr.mxu0 0.0
    %368 = vmatpush1.msra.mxu0 0.0
    %369 = vmatprep.subr.mxu0 0.0
    %370 = vmatpush1.msra.mxu0 0.0
    %371 = vmatprep.subr.mxu0 0.0
    %372 = vmatpush1.msra.mxu0 0.0
    %373 = vmatprep.subr.mxu0 0.0
    %374 = vmatpush1.msra.mxu0 0.0
    %375 = vmatprep.subr.mxu0 0.0
    %376 = vmatpush1.msra.mxu0 0.0
    %377 = vmatprep.subr.mxu0 0.0
    %378 = vmatpush1.msra.mxu0 0.0
    %379 = vmatprep.subr.mxu0 0.0
    %380 = vmatpush1.msra.mxu0 0.0
    %381 = vmatprep.subr.mxu0 0.0
    %382 = vmatpush1.msra.mxu0 0.0
    %383 = vmatprep.subr.mxu0 0.0
    %384 = vmatpush1.msra.mxu0 0.0
    %385 = vmatprep.subr.mxu0 0.0
    %386 = vmatpush1.msra.mxu0 0.0
    %387 = vmatprep.subr.mxu0 0.0
    %388 = vmatpush1.msra.mxu0 0.0
    %389 = vmatprep.subr.mxu0 0.0
    %390 = vmatpush1.msra.mxu0 0.0
    %391 = vmatprep.subr.mxu0 0.0
    %392 = vmatpush1.msra.mxu0 0.0
    %393 = vmatprep.subr.mxu0 0.0
    %394 = vmatpush1.msra.mxu0 0.0
    %395 = vmatprep.mubr.f32.mxu0 0.0
    %396 = vmatmul.mubr.f32.gmra.mrb[0].mxu0 %v329
    %v397 = vpop.f32.mrb[0].mxu0
    %v398 = vadd.f32 0.0, %v397
    %v399 = vpop.f32.mrb[0].mxu0
    %400 = vdwg.mxu0
    %v402 = vrot.slane %v398, 6
    %v404 = vadd.f32 %v216, %v402
    %v405 = vxor.u32 %v404, 2147483648
    %v406 = vmul.f32 %v405, 1.442695
    %v407 = vpow.pop %v406
    %v408 = vadd.f32 %v407, 1.0
    %v409 = vrcp.pop %v408
    %v410 = vmul.f32 1.0, %v409
    %v411 = vtanh.pop %v404
    %v413 = vrot.slane %v319, 6
    %v415 = vmul.f32 %v410, %v413
    %417 = vrot.lane.b32.xlu0 %v411, 64
    %v418 = vpop.permute.xlu0 %417
    %v420 = vmul.f32 %v410, %v418
    %422 = vrot.lane.b32.xlu0 %v420, 32
    %v423 = vpop.permute.xlu0 %422
    %v425 = vadd.f32 %v415, %v423
    %v426 = vtanh.pop %v425
    %428 = vrot.lane.b32.xlu0 %v426, 64
    %v429 = vpop.permute.xlu0 %428
    %v431 = vmul.f32 %v410, %v429
    %v433 = vrot.slane %v431, 2
    %434 = vrot.lane.b32.xlu0 %v433, 32
    %v435 = vpop.permute.xlu0 %434
    %v436 = vsel %vm142, %v435, 0
    %438 = vmatprep.subr.mxu0 0.0
    %439 = vmatpush1.msra.mxu0 %v224
    %440 = vmatprep.subr.mxu0 0.0
    %441 = vmatpush1.msra.mxu0 %v225
    %442 = vmatprep.subr.mxu0 0.0
    %443 = vmatpush1.msra.mxu0 %v226
    %444 = vmatprep.subr.mxu0 0.0
    %445 = vmatpush1.msra.mxu0 %v227
    %446 = vmatprep.subr.mxu0 0.0
    %447 = vmatpush1.msra.mxu0 0.0
    %448 = vmatprep.subr.mxu0 0.0
    %449 = vmatpush1.msra.mxu0 0.0
    %450 = vmatprep.subr.mxu0 0.0
    %451 = vmatpush1.msra.mxu0 0.0
    %452 = vmatprep.subr.mxu0 0.0
    %453 = vmatpush1.msra.mxu0 0.0
    %454 = vmatprep.subr.mxu0 0.0
    %455 = vmatpush1.msra.mxu0 0.0
    %456 = vmatprep.subr.mxu0 0.0
    %457 = vmatpush1.msra.mxu0 0.0
    %458 = vmatprep.subr.mxu0 0.0
    %459 = vmatpush1.msra.mxu0 0.0
    %460 = vmatprep.subr.mxu0 0.0
    %461 = vmatpush1.msra.mxu0 0.0
    %462 = vmatprep.subr.mxu0 0.0
    %463 = vmatpush1.msra.mxu0 0.0
    %464 = vmatprep.subr.mxu0 0.0
    %465 = vmatpush1.msra.mxu0 0.0
    %466 = vmatprep.subr.mxu0 0.0
    %467 = vmatpush1.msra.mxu0 0.0
    %468 = vmatprep.subr.mxu0 0.0
    %469 = vmatpush1.msra.mxu0 0.0
    %470 = vmatprep.subr.mxu0 0.0
    %471 = vmatpush1.msra.mxu0 0.0
    %472 = vmatprep.subr.mxu0 0.0
    %473 = vmatpush1.msra.mxu0 0.0
    %474 = vmatprep.subr.mxu0 0.0
    %475 = vmatpush1.msra.mxu0 0.0
    %476 = vmatprep.subr.mxu0 0.0
    %477 = vmatpush1.msra.mxu0 0.0
    %478 = vmatprep.subr.mxu0 0.0
    %479 = vmatpush1.msra.mxu0 0.0
    %480 = vmatprep.subr.mxu0 0.0
    %481 = vmatpush1.msra.mxu0 0.0
    %482 = vmatprep.subr.mxu0 0.0
    %483 = vmatpush1.msra.mxu0 0.0
    %484 = vmatprep.subr.mxu0 0.0
    %485 = vmatpush1.msra.mxu0 0.0
    %486 = vmatprep.subr.mxu0 0.0
    %487 = vmatpush1.msra.mxu0 0.0
    %488 = vmatprep.subr.mxu0 0.0
    %489 = vmatpush1.msra.mxu0 0.0
    %490 = vmatprep.subr.mxu0 0.0
    %491 = vmatpush1.msra.mxu0 0.0
    %492 = vmatprep.subr.mxu0 0.0
    %493 = vmatpush1.msra.mxu0 0.0
    %494 = vmatprep.subr.mxu0 0.0
    %495 = vmatpush1.msra.mxu0 0.0
    %496 = vmatprep.subr.mxu0 0.0
    %497 = vmatpush1.msra.mxu0 0.0
    %498 = vmatprep.subr.mxu0 0.0
    %499 = vmatpush1.msra.mxu0 0.0
    %500 = vmatprep.subr.mxu0 0.0
    %501 = vmatpush1.msra.mxu0 0.0
    %502 = vmatprep.mubr.f32.mxu0 0.0
    %503 = vmatmul.mubr.f32.gmra.mrb[0].mxu0 %v436
    %v504 = vpop.f32.mrb[0].mxu0
    %v505 = vadd.f32 0.0, %v504
    %v506 = vpop.f32.mrb[0].mxu0
    %507 = vdwg.mxu0
    %v509 = vrot.slane %v505, 4
    %v511 = vadd.f32 %v216, %v509
    %v512 = vxor.u32 %v511, 2147483648
    %v513 = vmul.f32 %v512, 1.442695
    %v514 = vpow.pop %v513
    %v515 = vadd.f32 %v514, 1.0
    %v516 = vrcp.pop %v515
    %v517 = vmul.f32 1.0, %v516
    %v518 = vtanh.pop %v511
    %v520 = vrot.slane %v425, 6
    %v522 = vmul.f32 %v517, %v520
    %524 = vrot.lane.b32.xlu0 %v518, 64
    %v525 = vpop.permute.xlu0 %524
    %v527 = vmul.f32 %v517, %v525
    %529 = vrot.lane.b32.xlu0 %v527, 32
    %v530 = vpop.permute.xlu0 %529
    %v532 = vadd.f32 %v522, %v530
    %v533 = vtanh.pop %v532
    %535 = vrot.lane.b32.xlu0 %v533, 64
    %v536 = vpop.permute.xlu0 %535
    %v538 = vmul.f32 %v517, %v536
    %v540 = vrot.slane %v538, 4
    %541 = vrot.lane.b32.xlu0 %v540, 32
    %v542 = vpop.permute.xlu0 %541
    %v543 = vsel %vm142, %v542, 0
    %545 = vmatprep.subr.mxu0 0.0
    %546 = vmatpush1.msra.mxu0 %v224
    %547 = vmatprep.subr.mxu0 0.0
    %548 = vmatpush1.msra.mxu0 %v225
    %549 = vmatprep.subr.mxu0 0.0
    %550 = vmatpush1.msra.mxu0 %v226
    %551 = vmatprep.subr.mxu0 0.0
    %552 = vmatpush1.msra.mxu0 %v227
    %553 = vmatprep.subr.mxu0 0.0
    %554 = vmatpush1.msra.mxu0 0.0
    %555 = vmatprep.subr.mxu0 0.0
    %556 = vmatpush1.msra.mxu0 0.0
    %557 = vmatprep.subr.mxu0 0.0
    %558 = vmatpush1.msra.mxu0 0.0
    %559 = vmatprep.subr.mxu0 0.0
    %560 = vmatpush1.msra.mxu0 0.0
    %561 = vmatprep.subr.mxu0 0.0
    %562 = vmatpush1.msra.mxu0 0.0
    %563 = vmatprep.subr.mxu0 0.0
    %564 = vmatpush1.msra.mxu0 0.0
    %565 = vmatprep.subr.mxu0 0.0
    %566 = vmatpush1.msra.mxu0 0.0
    %567 = vmatprep.subr.mxu0 0.0
    %568 = vmatpush1.msra.mxu0 0.0
    %569 = vmatprep.subr.mxu0 0.0
    %570 = vmatpush1.msra.mxu0 0.0
    %571 = vmatprep.subr.mxu0 0.0
    %572 = vmatpush1.msra.mxu0 0.0
    %573 = vmatprep.subr.mxu0 0.0
    %574 = vmatpush1.msra.mxu0 0.0
    %575 = vmatprep.subr.mxu0 0.0
    %576 = vmatpush1.msra.mxu0 0.0
    %577 = vmatprep.subr.mxu0 0.0
    %578 = vmatpush1.msra.mxu0 0.0
    %579 = vmatprep.subr.mxu0 0.0
    %580 = vmatpush1.msra.mxu0 0.0
    %581 = vmatprep.subr.mxu0 0.0
    %582 = vmatpush1.msra.mxu0 0.0
    %583 = vmatprep.subr.mxu0 0.0
    %584 = vmatpush1.msra.mxu0 0.0
    %585 = vmatprep.subr.mxu0 0.0
    %586 = vmatpush1.msra.mxu0 0.0
    %587 = vmatprep.subr.mxu0 0.0
    %588 = vmatpush1.msra.mxu0 0.0
    %589 = vmatprep.subr.mxu0 0.0
    %590 = vmatpush1.msra.mxu0 0.0
    %591 = vmatprep.subr.mxu0 0.0
    %592 = vmatpush1.msra.mxu0 0.0
    %593 = vmatprep.subr.mxu0 0.0
    %594 = vmatpush1.msra.mxu0 0.0
    %595 = vmatprep.subr.mxu0 0.0
    %596 = vmatpush1.msra.mxu0 0.0
    %597 = vmatprep.subr.mxu0 0.0
    %598 = vmatpush1.msra.mxu0 0.0
    %599 = vmatprep.subr.mxu0 0.0
    %600 = vmatpush1.msra.mxu0 0.0
    %601 = vmatprep.subr.mxu0 0.0
    %602 = vmatpush1.msra.mxu0 0.0
    %603 = vmatprep.subr.mxu0 0.0
    %604 = vmatpush1.msra.mxu0 0.0
    %605 = vmatprep.subr.mxu0 0.0
    %606 = vmatpush1.msra.mxu0 0.0
    %607 = vmatprep.subr.mxu0 0.0
    %608 = vmatpush1.msra.mxu0 0.0
    %609 = vmatprep.mubr.f32.mxu0 0.0
    %610 = vmatmul.mubr.f32.gmra.mrb[0].mxu0 %v543
    %v611 = vpop.f32.mrb[0].mxu0
    %v612 = vadd.f32 0.0, %v611
    %v613 = vpop.f32.mrb[0].mxu0
    %614 = vdwg.mxu0
    %v616 = vrot.slane %v612, 2
    %v618 = vadd.f32 %v216, %v616
    %v619 = vxor.u32 %v618, 2147483648
    %v620 = vmul.f32 %v619, 1.442695
    %v621 = vpow.pop %v620
    %v622 = vadd.f32 %v621, 1.0
    %v623 = vrcp.pop %v622
    %v624 = vmul.f32 1.0, %v623
    %v625 = vtanh.pop %v618
    %v627 = vrot.slane %v532, 6
    %v629 = vmul.f32 %v624, %v627
    %631 = vrot.lane.b32.xlu0 %v625, 64
    %v632 = vpop.permute.xlu0 %631
    %v634 = vmul.f32 %v624, %v632
    %636 = vrot.lane.b32.xlu0 %v634, 32
    %v637 = vpop.permute.xlu0 %636
    %v639 = vadd.f32 %v629, %v637
    %v640 = vtanh.pop %v639
    %642 = vrot.lane.b32.xlu0 %v640, 64
    %v643 = vpop.permute.xlu0 %642
    %v645 = vmul.f32 %v624, %v643
    %v647 = vrot.slane %v645, 6
    %648 = vrot.lane.b32.xlu0 %v647, 32
    %v649 = vpop.permute.xlu0 %648
    %v650 = vsel %vm142, %v649, 0
    %652 = vmatprep.subr.mxu0 0.0
    %653 = vmatpush1.msra.mxu0 %v224
    %654 = vmatprep.subr.mxu0 0.0
    %655 = vmatpush1.msra.mxu0 %v225
    %656 = vmatprep.subr.mxu0 0.0
    %657 = vmatpush1.msra.mxu0 %v226
    %658 = vmatprep.subr.mxu0 0.0
    %659 = vmatpush1.msra.mxu0 %v227
    %660 = vmatprep.subr.mxu0 0.0
    %661 = vmatpush1.msra.mxu0 0.0
    %662 = vmatprep.subr.mxu0 0.0
    %663 = vmatpush1.msra.mxu0 0.0
    %664 = vmatprep.subr.mxu0 0.0
    %665 = vmatpush1.msra.mxu0 0.0
    %666 = vmatprep.subr.mxu0 0.0
    %667 = vmatpush1.msra.mxu0 0.0
    %668 = vmatprep.subr.mxu0 0.0
    %669 = vmatpush1.msra.mxu0 0.0
    %670 = vmatprep.subr.mxu0 0.0
    %671 = vmatpush1.msra.mxu0 0.0
    %672 = vmatprep.subr.mxu0 0.0
    %673 = vmatpush1.msra.mxu0 0.0
    %674 = vmatprep.subr.mxu0 0.0
    %675 = vmatpush1.msra.mxu0 0.0
    %676 = vmatprep.subr.mxu0 0.0
    %677 = vmatpush1.msra.mxu0 0.0
    %678 = vmatprep.subr.mxu0 0.0
    %679 = vmatpush1.msra.mxu0 0.0
    %680 = vmatprep.subr.mxu0 0.0
    %681 = vmatpush1.msra.mxu0 0.0
    %682 = vmatprep.subr.mxu0 0.0
    %683 = vmatpush1.msra.mxu0 0.0
    %684 = vmatprep.subr.mxu0 0.0
    %685 = vmatpush1.msra.mxu0 0.0
    %686 = vmatprep.subr.mxu0 0.0
    %687 = vmatpush1.msra.mxu0 0.0
    %688 = vmatprep.subr.mxu0 0.0
    %689 = vmatpush1.msra.mxu0 0.0
    %690 = vmatprep.subr.mxu0 0.0
    %691 = vmatpush1.msra.mxu0 0.0
    %692 = vmatprep.subr.mxu0 0.0
    %693 = vmatpush1.msra.mxu0 0.0
    %694 = vmatprep.subr.mxu0 0.0
    %695 = vmatpush1.msra.mxu0 0.0
    %696 = vmatprep.subr.mxu0 0.0
    %697 = vmatpush1.msra.mxu0 0.0
    %698 = vmatprep.subr.mxu0 0.0
    %699 = vmatpush1.msra.mxu0 0.0
    %700 = vmatprep.subr.mxu0 0.0
    %701 = vmatpush1.msra.mxu0 0.0
    %702 = vmatprep.subr.mxu0 0.0
    %703 = vmatpush1.msra.mxu0 0.0
    %704 = vmatprep.subr.mxu0 0.0
    %705 = vmatpush1.msra.mxu0 0.0
    %706 = vmatprep.subr.mxu0 0.0
    %707 = vmatpush1.msra.mxu0 0.0
    %708 = vmatprep.subr.mxu0 0.0
    %709 = vmatpush1.msra.mxu0 0.0
    %710 = vmatprep.subr.mxu0 0.0
    %711 = vmatpush1.msra.mxu0 0.0
    %712 = vmatprep.subr.mxu0 0.0
    %713 = vmatpush1.msra.mxu0 0.0
    %714 = vmatprep.subr.mxu0 0.0
    %715 = vmatpush1.msra.mxu0 0.0
    %716 = vmatprep.mubr.f32.mxu0 0.0
    %717 = vmatmul.mubr.f32.gmra.mrb[0].mxu0 %v650
    %v718 = vpop.f32.mrb[0].mxu0
    %v719 = vadd.f32 0.0, %v718
    %v720 = vpop.f32.mrb[0].mxu0
    %721 = vdwg.mxu0
    %v722 = vadd.f32 %v221, %v719
    %v723 = vxor.u32 %v722, 2147483648
    %v724 = vmul.f32 %v723, 1.442695
    %v725 = vpow.pop %v724
    %v726 = vadd.f32 %v725, 1.0
    %v727 = vrcp.pop %v726
    %v728 = vmul.f32 1.0, %v727
    %v729 = vtanh.pop %v722
    %v731 = vrot.slane %v639, 6
    %v733 = vmul.f32 %v728, %v731
    %735 = vrot.lane.b32.xlu0 %v729, 64
    %v736 = vpop.permute.xlu0 %735
    %v738 = vmul.f32 %v728, %v736
    %740 = vrot.lane.b32.xlu0 %v738, 32
    %v741 = vpop.permute.xlu0 %740
    %v743 = vadd.f32 %v733, %v741
    %v744 = vtanh.pop %v743
    %746 = vrot.lane.b32.xlu0 %v744, 64
    %v747 = vpop.permute.xlu0 %746
    %v749 = vmul.f32 %v728, %v747
    %751 = vrot.lane.b32.xlu0 %v749, 32
    %v752 = vpop.permute.xlu0 %751
    %v753 = vsel %vm142, %v752, 0
    %755 = vmatprep.subr.mxu0 0.0
    %756 = vmatpush1.msra.mxu0 %v224
    %757 = vmatprep.subr.mxu0 0.0
    %758 = vmatpush1.msra.mxu0 %v225
    %759 = vmatprep.subr.mxu0 0.0
    %760 = vmatpush1.msra.mxu0 %v226
    %761 = vmatprep.subr.mxu0 0.0
    %762 = vmatpush1.msra.mxu0 %v227
    %763 = vmatprep.subr.mxu0 0.0
    %764 = vmatpush1.msra.mxu0 0.0
    %765 = vmatprep.subr.mxu0 0.0
    %766 = vmatpush1.msra.mxu0 0.0
    %767 = vmatprep.subr.mxu0 0.0
    %768 = vmatpush1.msra.mxu0 0.0
    %769 = vmatprep.subr.mxu0 0.0
    %770 = vmatpush1.msra.mxu0 0.0
    %771 = vmatprep.subr.mxu0 0.0
    %772 = vmatpush1.msra.mxu0 0.0
    %773 = vmatprep.subr.mxu0 0.0
    %774 = vmatpush1.msra.mxu0 0.0
    %775 = vmatprep.subr.mxu0 0.0
    %776 = vmatpush1.msra.mxu0 0.0
    %777 = vmatprep.subr.mxu0 0.0
    %778 = vmatpush1.msra.mxu0 0.0
    %779 = vmatprep.subr.mxu0 0.0
    %780 = vmatpush1.msra.mxu0 0.0
    %781 = vmatprep.subr.mxu0 0.0
    %782 = vmatpush1.msra.mxu0 0.0
    %783 = vmatprep.subr.mxu0 0.0
    %784 = vmatpush1.msra.mxu0 0.0
    %785 = vmatprep.subr.mxu0 0.0
    %786 = vmatpush1.msra.mxu0 0.0
    %787 = vmatprep.subr.mxu0 0.0
    %788 = vmatpush1.msra.mxu0 0.0
    %789 = vmatprep.subr.mxu0 0.0
    %790 = vmatpush1.msra.mxu0 0.0
    %791 = vmatprep.subr.mxu0 0.0
    %792 = vmatpush1.msra.mxu0 0.0
    %793 = vmatprep.subr.mxu0 0.0
    %794 = vmatpush1.msra.mxu0 0.0
    %795 = vmatprep.subr.mxu0 0.0
    %796 = vmatpush1.msra.mxu0 0.0
    %797 = vmatprep.subr.mxu0 0.0
    %798 = vmatpush1.msra.mxu0 0.0
    %799 = vmatprep.subr.mxu0 0.0
    %800 = vmatpush1.msra.mxu0 0.0
    %801 = vmatprep.subr.mxu0 0.0
    %802 = vmatpush1.msra.mxu0 0.0
    %803 = vmatprep.subr.mxu0 0.0
    %804 = vmatpush1.msra.mxu0 0.0
    %805 = vmatprep.subr.mxu0 0.0
    %806 = vmatpush1.msra.mxu0 0.0
    %807 = vmatprep.subr.mxu0 0.0
    %808 = vmatpush1.msra.mxu0 0.0
    %809 = vmatprep.subr.mxu0 0.0
    %810 = vmatpush1.msra.mxu0 0.0
    %811 = vmatprep.subr.mxu0 0.0
    %812 = vmatpush1.msra.mxu0 0.0
    %813 = vmatprep.subr.mxu0 0.0
    %814 = vmatpush1.msra.mxu0 0.0
    %815 = vmatprep.subr.mxu0 0.0
    %816 = vmatpush1.msra.mxu0 0.0
    %817 = vmatprep.subr.mxu0 0.0
    %818 = vmatpush1.msra.mxu0 0.0
    %819 = vmatprep.mubr.f32.mxu0 0.0
    %820 = vmatmul.mubr.f32.gmra.mrb[0].mxu0 %v753
    %v821 = vpop.f32.mrb[0].mxu0
    %v822 = vadd.f32 0.0, %v821
    %v823 = vpop.f32.mrb[0].mxu0
    %824 = vdwg.mxu0
    %v826 = vrot.slane %v822, 6
    %v828 = vadd.f32 %v221, %v826
    %v829 = vxor.u32 %v828, 2147483648
    %v830 = vmul.f32 %v829, 1.442695
    %v831 = vpow.pop %v830
    %v832 = vadd.f32 %v831, 1.0
    %v833 = vrcp.pop %v832
    %v834 = vmul.f32 1.0, %v833
    %v835 = vtanh.pop %v828
    %v837 = vrot.slane %v743, 6
    %v839 = vmul.f32 %v834, %v837
    %841 = vrot.lane.b32.xlu0 %v835, 64
    %v842 = vpop.permute.xlu0 %841
    %v844 = vmul.f32 %v834, %v842
    %846 = vrot.lane.b32.xlu0 %v844, 32
    %v847 = vpop.permute.xlu0 %846
    %v849 = vadd.f32 %v839, %v847
    %v850 = vtanh.pop %v849
    %852 = vrot.lane.b32.xlu0 %v850, 64
    %v853 = vpop.permute.xlu0 %852
    %v855 = vmul.f32 %v834, %v853
    %v857 = vrot.slane %v855, 2
    %858 = vrot.lane.b32.xlu0 %v857, 32
    %v859 = vpop.permute.xlu0 %858
    %v860 = vsel %vm142, %v859, 0
    %862 = vmatprep.subr.mxu0 0.0
    %863 = vmatpush1.msra.mxu0 %v224
    %864 = vmatprep.subr.mxu0 0.0
    %865 = vmatpush1.msra.mxu0 %v225
    %866 = vmatprep.subr.mxu0 0.0
    %867 = vmatpush1.msra.mxu0 %v226
    %868 = vmatprep.subr.mxu0 0.0
    %869 = vmatpush1.msra.mxu0 %v227
    %870 = vmatprep.subr.mxu0 0.0
    %871 = vmatpush1.msra.mxu0 0.0
    %872 = vmatprep.subr.mxu0 0.0
    %873 = vmatpush1.msra.mxu0 0.0
    %874 = vmatprep.subr.mxu0 0.0
    %875 = vmatpush1.msra.mxu0 0.0
    %876 = vmatprep.subr.mxu0 0.0
    %877 = vmatpush1.msra.mxu0 0.0
    %878 = vmatprep.subr.mxu0 0.0
    %879 = vmatpush1.msra.mxu0 0.0
    %880 = vmatprep.subr.mxu0 0.0
    %881 = vmatpush1.msra.mxu0 0.0
    %882 = vmatprep.subr.mxu0 0.0
    %883 = vmatpush1.msra.mxu0 0.0
    %884 = vmatprep.subr.mxu0 0.0
    %885 = vmatpush1.msra.mxu0 0.0
    %886 = vmatprep.subr.mxu0 0.0
    %887 = vmatpush1.msra.mxu0 0.0
    %888 = vmatprep.subr.mxu0 0.0
    %889 = vmatpush1.msra.mxu0 0.0
    %890 = vmatprep.subr.mxu0 0.0
    %891 = vmatpush1.msra.mxu0 0.0
    %892 = vmatprep.subr.mxu0 0.0
    %893 = vmatpush1.msra.mxu0 0.0
    %894 = vmatprep.subr.mxu0 0.0
    %895 = vmatpush1.msra.mxu0 0.0
    %896 = vmatprep.subr.mxu0 0.0
    %897 = vmatpush1.msra.mxu0 0.0
    %898 = vmatprep.subr.mxu0 0.0
    %899 = vmatpush1.msra.mxu0 0.0
    %900 = vmatprep.subr.mxu0 0.0
    %901 = vmatpush1.msra.mxu0 0.0
    %902 = vmatprep.subr.mxu0 0.0
    %903 = vmatpush1.msra.mxu0 0.0
    %904 = vmatprep.subr.mxu0 0.0
    %905 = vmatpush1.msra.mxu0 0.0
    %906 = vmatprep.subr.mxu0 0.0
    %907 = vmatpush1.msra.mxu0 0.0
    %908 = vmatprep.subr.mxu0 0.0
    %909 = vmatpush1.msra.mxu0 0.0
    %910 = vmatprep.subr.mxu0 0.0
    %911 = vmatpush1.msra.mxu0 0.0
    %912 = vmatprep.subr.mxu0 0.0
    %913 = vmatpush1.msra.mxu0 0.0
    %914 = vmatprep.subr.mxu0 0.0
    %915 = vmatpush1.msra.mxu0 0.0
    %916 = vmatprep.subr.mxu0 0.0
    %917 = vmatpush1.msra.mxu0 0.0
    %918 = vmatprep.subr.mxu0 0.0
    %919 = vmatpush1.msra.mxu0 0.0
    %920 = vmatprep.subr.mxu0 0.0
    %921 = vmatpush1.msra.mxu0 0.0
    %922 = vmatprep.subr.mxu0 0.0
    %923 = vmatpush1.msra.mxu0 0.0
    %924 = vmatprep.subr.mxu0 0.0
    %925 = vmatpush1.msra.mxu0 0.0
    %926 = vmatprep.mubr.f32.mxu0 0.0
    %927 = vmatmul.mubr.f32.gmra.mrb[0].mxu0 %v860
    %v928 = vpop.f32.mrb[0].mxu0
    %v929 = vadd.f32 0.0, %v928
    %v930 = vpop.f32.mrb[0].mxu0
    %931 = vdwg.mxu0
    %v933 = vrot.slane %v929, 4
    %v935 = vadd.f32 %v221, %v933
    %v936 = vxor.u32 %v935, 2147483648
    %v937 = vmul.f32 %v936, 1.442695
    %v938 = vpow.pop %v937
    %v939 = vadd.f32 %v938, 1.0
    %v940 = vrcp.pop %v939
    %v941 = vmul.f32 1.0, %v940
    %v942 = vtanh.pop %v935
    %v944 = vrot.slane %v849, 6
    %v946 = vmul.f32 %v941, %v944
    %948 = vrot.lane.b32.xlu0 %v942, 64
    %v949 = vpop.permute.xlu0 %948
    %v951 = vmul.f32 %v941, %v949
    %953 = vrot.lane.b32.xlu0 %v951, 32
    %v954 = vpop.permute.xlu0 %953
    %v956 = vadd.f32 %v946, %v954
    %v957 = vtanh.pop %v956
    %959 = vrot.lane.b32.xlu0 %v957, 64
    %v960 = vpop.permute.xlu0 %959
    %v962 = vmul.f32 %v941, %v960
    %v964 = vrot.slane %v962, 4
    %965 = vrot.lane.b32.xlu0 %v964, 32
    %v966 = vpop.permute.xlu0 %965
    %v967 = vsel %vm142, %v966, 0
    %969 = vmatprep.subr.mxu0 0.0
    %970 = vmatpush1.msra.mxu0 %v224
    %971 = vmatprep.subr.mxu0 0.0
    %972 = vmatpush1.msra.mxu0 %v225
    %973 = vmatprep.subr.mxu0 0.0
    %974 = vmatpush1.msra.mxu0 %v226
    %975 = vmatprep.subr.mxu0 0.0
    %976 = vmatpush1.msra.mxu0 %v227
    %977 = vmatprep.subr.mxu0 0.0
    %978 = vmatpush1.msra.mxu0 0.0
    %979 = vmatprep.subr.mxu0 0.0
    %980 = vmatpush1.msra.mxu0 0.0
    %981 = vmatprep.subr.mxu0 0.0
    %982 = vmatpush1.msra.mxu0 0.0
    %983 = vmatprep.subr.mxu0 0.0
    %984 = vmatpush1.msra.mxu0 0.0
    %985 = vmatprep.subr.mxu0 0.0
    %986 = vmatpush1.msra.mxu0 0.0
    %987 = vmatprep.subr.mxu0 0.0
    %988 = vmatpush1.msra.mxu0 0.0
    %989 = vmatprep.subr.mxu0 0.0
    %990 = vmatpush1.msra.mxu0 0.0
    %991 = vmatprep.subr.mxu0 0.0
    %992 = vmatpush1.msra.mxu0 0.0
    %993 = vmatprep.subr.mxu0 0.0
    %994 = vmatpush1.msra.mxu0 0.0
    %995 = vmatprep.subr.mxu0 0.0
    %996 = vmatpush1.msra.mxu0 0.0
    %997 = vmatprep.subr.mxu0 0.0
    %998 = vmatpush1.msra.mxu0 0.0
    %999 = vmatprep.subr.mxu0 0.0
    %1000 = vmatpush1.msra.mxu0 0.0
    %1001 = vmatprep.subr.mxu0 0.0
    %1002 = vmatpush1.msra.mxu0 0.0
    %1003 = vmatprep.subr.mxu0 0.0
    %1004 = vmatpush1.msra.mxu0 0.0
    %1005 = vmatprep.subr.mxu0 0.0
    %1006 = vmatpush1.msra.mxu0 0.0
    %1007 = vmatprep.subr.mxu0 0.0
    %1008 = vmatpush1.msra.mxu0 0.0
    %1009 = vmatprep.subr.mxu0 0.0
    %1010 = vmatpush1.msra.mxu0 0.0
    %1011 = vmatprep.subr.mxu0 0.0
    %1012 = vmatpush1.msra.mxu0 0.0
    %1013 = vmatprep.subr.mxu0 0.0
    %1014 = vmatpush1.msra.mxu0 0.0
    %1015 = vmatprep.subr.mxu0 0.0
    %1016 = vmatpush1.msra.mxu0 0.0
    %1017 = vmatprep.subr.mxu0 0.0
    %1018 = vmatpush1.msra.mxu0 0.0
    %1019 = vmatprep.subr.mxu0 0.0
    %1020 = vmatpush1.msra.mxu0 0.0
    %1021 = vmatprep.subr.mxu0 0.0
    %1022 = vmatpush1.msra.mxu0 0.0
    %1023 = vmatprep.subr.mxu0 0.0
    %1024 = vmatpush1.msra.mxu0 0.0
    %1025 = vmatprep.subr.mxu0 0.0
    %1026 = vmatpush1.msra.mxu0 0.0
    %1027 = vmatprep.subr.mxu0 0.0
    %1028 = vmatpush1.msra.mxu0 0.0
    %1029 = vmatprep.subr.mxu0 0.0
    %1030 = vmatpush1.msra.mxu0 0.0
    %1031 = vmatprep.subr.mxu0 0.0
    %1032 = vmatpush1.msra.mxu0 0.0
    %1033 = vmatprep.mubr.f32.mxu0 0.0
    %1034 = vmatmul.mubr.f32.gmra.mrb[0].mxu0 %v967
    %v1035 = vpop.f32.mrb[0].mxu0
    %v1036 = vadd.f32 0.0, %v1035
    %v1037 = vpop.f32.mrb[0].mxu0
    %1038 = vdwg.mxu0
    %v1040 = vrot.slane %v1036, 2
    %v1042 = vadd.f32 %v221, %v1040
    %v1043 = vxor.u32 %v1042, 2147483648
    %v1044 = vmul.f32 %v1043, 1.442695
    %v1045 = vpow.pop %v1044
    %v1046 = vadd.f32 %v1045, 1.0
    %v1047 = vrcp.pop %v1046
    %v1048 = vmul.f32 1.0, %v1047
    %v1049 = vtanh.pop %v1042
    %v1051 = vrot.slane %v956, 6
    %v1053 = vmul.f32 %v1048, %v1051
    %1055 = vrot.lane.b32.xlu0 %v1049, 64
    %v1056 = vpop.permute.xlu0 %1055
    %v1058 = vmul.f32 %v1048, %v1056
    %1060 = vrot.lane.b32.xlu0 %v1058, 32
    %v1061 = vpop.permute.xlu0 %1060
    %v1063 = vadd.f32 %v1053, %v1061
    %v1064 = vtanh.pop %v1063
    %1066 = vrot.lane.b32.xlu0 %v1064, 64
    %v1067 = vpop.permute.xlu0 %1066
    %v1069 = vmul.f32 %v1048, %v1067
    %1071 = vrot.lane.b32.xlu0 %v433, 64
    %v1072 = vpop.permute.xlu0 %1071
    %1074 = vrot.lane.b32.xlu0 %v540, 96
    %v1075 = vpop.permute.xlu0 %1074
    %1079 = vrot.lane.b32.xlu0 %v857, 64
    %v1080 = vpop.permute.xlu0 %1079
    %1082 = vrot.lane.b32.xlu0 %v964, 96
    %v1083 = vpop.permute.xlu0 %1082
    %v1086 = vrot.slane %v1069, 6
    %v1088 = vsel %vm142, %v328, %v1072
    %vm1089 = vcmask 523264
    %v1090 = vsel %vm1089, %v1088, %v1075
    %vm1091 = vcmask 785408
    %v1092 = vsel %vm1091, %v1090, %v647
    %v1093 = vsel %vm142, %v752, %v1080
    %v1094 = vsel %vm1089, %v1093, %v1083
    %v1095 = vsel %vm1091, %v1094, %v1086
    %v1098 = vcombine.low %v1092, %v1095
    %v1100 = vunpack.c.l.s4 1983009808
    %v1101 = vunpack.c.0.s8 %v1100
    %v1102 = vlaneseq
    %v1103 = vshrl.u32 %v1102, 7
    %v1104 = vsub.s32 %v1101, %v1103
    %v1105 = vrot.slane %v1098, %v1104
    %1107 = vst [vmem:[#allocation7] sm:$0xf] %v1105
    // Predicated region
    $region18: #{tpu_custom_call.1} parent=1 // pred_check
      _
    $region19: #{tpu_custom_call.1} parent=1 // pred_check_branch
      %1109 = sbr.rel (0) target = $region21
    $region20: #{tpu_custom_call.1} parent=1 // pred_region
      %s1111 = ssub.s32 64, 64
      %1112 = vsyncadd [#allocation4], %s1111
      %s1114 = sshll.u32 [#allocation7], 4
      %s1115 = int_to_ptr.vmem [resolvable:$true] %s1114
      %1117 = dma.vmem_to_hbm [thread:$0]  %s1115, 64, %s2, [#allocation4]
    $region21: #{tpu_custom_call.1} parent=1 // pred_fallthru
      _
    // Predicated region
    $region22: #{tpu_custom_call.1} parent=1 // pred_check
      _
    $region23: #{tpu_custom_call.1} parent=1 // pred_check_branch
      %1119 = sbr.rel (0) target = $region25
    $region24: #{tpu_custom_call.1} parent=1 // pred_region
      %1120 = dma.done [#allocation4], 64
    $region25: #{tpu_custom_call.1} parent=1 // pred_fallthru
      _
    %1121 = vsyncpa [#allocation3], 1
    %1122 = vsyncpa [#allocation6], 1
    %1123 = vsyncpa [#allocation4], 1

</llo_original>
